<compile_context>
chip_gen: v7x
topology: tpu7x:2x2x1
jax: 0.10.0
libtpu: 0.0.40
codegen_flags: <defaults>
</compile_context>

<pallas_src>
import functools

import jax
import jax.numpy as jnp
from jax import lax
from jax.experimental import pallas as pl
from jax.experimental.pallas import tpu as pltpu

P1 = 1            # module parameter: power exponent
DROP_P = 0.5      # F.dropout default p; training=True -> scale kept values by 1/(1-p)

_KEEP_PROB = 1.0 - DROP_P
# uint32 threshold so that P(hash < threshold) == keep probability (works for any p).
_KEEP_THRESHOLD = min(int(round(_KEEP_PROB * (1 << 32))), (1 << 32) - 1)
_SCALE = 1.0 / _KEEP_PROB


def _pow_dropout_kernel(x_ref, o_ref, *, seed):
    # x_ref / o_ref: VMEM refs holding the full (1, 2, 2) f32 array.
    x = x_ref[...]
    x2 = x if P1 == 1 else x ** P1          # fold the power at trace time (p1 == 1)

    # Counter-based hash PRNG (shift/xor/add only) so the kernel lowers on both
    # Mosaic TPU and the CPU/interpret path (pltpu.prng_* has no CPU lowering).
    shape = x2.shape
    idx = jnp.zeros(shape, jnp.uint32)
    for d, size in enumerate(shape):        # flat element index, built at trace time
        idx = idx * jnp.uint32(size) + lax.broadcasted_iota(jnp.uint32, shape, d)

    h = idx ^ jnp.uint32(seed & 0xFFFFFFFF)
    h = h + jnp.uint32(0x9E3779B9)
    h = h ^ (h << 13); h = h ^ (h >> 17); h = h ^ (h << 5)
    h = h + jnp.uint32(0x85EBCA6B)
    h = h ^ (h << 13); h = h ^ (h >> 17); h = h ^ (h << 5)

    keep = h < jnp.uint32(_KEEP_THRESHOLD)                  # P(keep) = 1 - DROP_P
    o_ref[...] = jnp.where(keep, x2 * jnp.float32(_SCALE),
                           jnp.zeros_like(x2)).astype(o_ref.dtype)
    # TODO(synk): torch.randint(0, 9, (1,)) in the original forward is unused dead code; omitted.


def m2_forward(x1, seed: int = 0):
    """Pallas equivalent of m2.forward: (x1 ** p1) then dropout(p=0.5, training=True)."""
    kernel = functools.partial(_pow_dropout_kernel, seed=int(seed))
    return pl.pallas_call(
        kernel,
        out_shape=jax.ShapeDtypeStruct(x1.shape, x1.dtype),
        in_specs=[pl.BlockSpec(memory_space=pltpu.MemorySpace.VMEM)],
        out_specs=pl.BlockSpec(memory_space=pltpu.MemorySpace.VMEM),
        # Write the result in place of the input buffer: no separate output
        # allocation / writeback DMA when the caller no longer needs x1.
        input_output_aliases={0: 0},
    )(x1)


if __name__ == "__main__":
    key = jax.random.PRNGKey(0)
    x1 = jax.random.normal(key, (1, 2, 2), dtype=jnp.float32)
    out = m2_forward(x1, seed=0)
    out = jax.block_until_ready(out)
    assert out.shape == (1, 2, 2) and out.dtype == jnp.float32
    print("KERNEL_OK")
</pallas_src>

<mosaic_0001>
module attributes {stable_mosaic.version = 11 : i64} {
  func.func @_pow_dropout_kernel(%arg0: memref<1x2x2xf32, #tpu.memory_space<vmem>>, %arg1: memref<1x2x2xf32, #tpu.memory_space<vmem>>) attributes {dimension_semantics = [], scalar_prefetch = 0 : i64, scratch_operands = 0 : i64, tpu.core_type = #tpu.core_type<tc>} {
    %c0 = arith.constant 0 : index
    %c0_0 = arith.constant 0 : index
    %c0_1 = arith.constant 0 : index
    %0 = vector.load %arg0[%c0, %c0_0, %c0_1] : memref<1x2x2xf32, #tpu.memory_space<vmem>>, vector<1x2x2xf32>
    %c0_i32 = arith.constant 0 : i32
    %1 = vector.broadcast %c0_i32 : i32 to vector<1x2x2xi32>
    %c1_i32 = arith.constant 1 : i32
    %2 = vector.broadcast %c1_i32 : i32 to vector<1x2x2xi32>
    %3 = arith.muli %1, %2 : vector<1x2x2xi32>
    %4 = tpu.iota {dimensions = array<i32: 0>} : vector<1x2x2xi32>
    %5 = arith.addi %3, %4 : vector<1x2x2xi32>
    %c2_i32 = arith.constant 2 : i32
    %6 = vector.broadcast %c2_i32 : i32 to vector<1x2x2xi32>
    %7 = arith.muli %5, %6 : vector<1x2x2xi32>
    %8 = tpu.iota {dimensions = array<i32: 1>} : vector<1x2x2xi32>
    %9 = arith.addi %7, %8 : vector<1x2x2xi32>
    %c2_i32_2 = arith.constant 2 : i32
    %10 = vector.broadcast %c2_i32_2 : i32 to vector<1x2x2xi32>
    %11 = arith.muli %9, %10 : vector<1x2x2xi32>
    %12 = tpu.iota {dimensions = array<i32: 2>} : vector<1x2x2xi32>
    %13 = arith.addi %11, %12 : vector<1x2x2xi32>
    %c0_i32_3 = arith.constant 0 : i32
    %14 = vector.broadcast %c0_i32_3 : i32 to vector<1x2x2xi32>
    %15 = arith.xori %13, %14 : vector<1x2x2xi32>
    %c-1640531527_i32 = arith.constant -1640531527 : i32
    %16 = vector.broadcast %c-1640531527_i32 : i32 to vector<1x2x2xi32>
    %17 = arith.addi %15, %16 : vector<1x2x2xi32>
    %c13_i32 = arith.constant 13 : i32
    %18 = vector.broadcast %c13_i32 : i32 to vector<1x2x2xi32>
    %19 = arith.shli %17, %18 : vector<1x2x2xi32>
    %20 = arith.xori %17, %19 : vector<1x2x2xi32>
    %c17_i32 = arith.constant 17 : i32
    %21 = vector.broadcast %c17_i32 : i32 to vector<1x2x2xi32>
    %22 = arith.shrui %20, %21 : vector<1x2x2xi32>
    %23 = arith.xori %20, %22 : vector<1x2x2xi32>
    %c5_i32 = arith.constant 5 : i32
    %24 = vector.broadcast %c5_i32 : i32 to vector<1x2x2xi32>
    %25 = arith.shli %23, %24 : vector<1x2x2xi32>
    %26 = arith.xori %23, %25 : vector<1x2x2xi32>
    %c-2048144789_i32 = arith.constant -2048144789 : i32
    %27 = vector.broadcast %c-2048144789_i32 : i32 to vector<1x2x2xi32>
    %28 = arith.addi %26, %27 : vector<1x2x2xi32>
    %c13_i32_4 = arith.constant 13 : i32
    %29 = vector.broadcast %c13_i32_4 : i32 to vector<1x2x2xi32>
    %30 = arith.shli %28, %29 : vector<1x2x2xi32>
    %31 = arith.xori %28, %30 : vector<1x2x2xi32>
    %c17_i32_5 = arith.constant 17 : i32
    %32 = vector.broadcast %c17_i32_5 : i32 to vector<1x2x2xi32>
    %33 = arith.shrui %31, %32 : vector<1x2x2xi32>
    %34 = arith.xori %31, %33 : vector<1x2x2xi32>
    %c5_i32_6 = arith.constant 5 : i32
    %35 = vector.broadcast %c5_i32_6 : i32 to vector<1x2x2xi32>
    %36 = arith.shli %34, %35 : vector<1x2x2xi32>
    %37 = arith.xori %34, %36 : vector<1x2x2xi32>
    %c-2147483648_i32 = arith.constant -2147483648 : i32
    %38 = vector.broadcast %c-2147483648_i32 : i32 to vector<1x2x2xi32>
    %39 = arith.cmpi ult, %37, %38 : vector<1x2x2xi32>
    %cst = arith.constant 2.000000e+00 : f32
    %40 = vector.broadcast %cst : f32 to vector<1x2x2xf32>
    %41 = arith.mulf %0, %40 : vector<1x2x2xf32>
    %cst_7 = arith.constant 0.000000e+00 : f32
    %42 = vector.broadcast %cst_7 : f32 to vector<1x2x2xf32>
    %43 = arith.select %39, %41, %42 : vector<1x2x2xi1>, vector<1x2x2xf32>
    %c0_8 = arith.constant 0 : index
    %c0_9 = arith.constant 0 : index
    %c0_10 = arith.constant 0 : index
    %44 = vector.load %arg1[%c0_8, %c0_9, %c0_10] : memref<1x2x2xf32, #tpu.memory_space<vmem>>, vector<1x2x2xf32>
    tpu.vector_store %arg1[%c0_8, %c0_9, %c0_10], %43 {strides = array<i32>} : memref<1x2x2xf32, #tpu.memory_space<vmem>>, vector<1x2x2xf32>,
    return
  }
}

</mosaic_0001>

<llo_original>
// kernel: tpu_custom_call.1
$region0: #{tpu_custom_call.1}
  #allocation0 [shape = 'u32[]', space=smem, size = 0x4, offset = 0x4, fixed_abs, tag = 'smem constant byte address 0x4 - core index']
  #allocation1 [shape = 'u32[144,128]{1,0:T(1,128)}', space=vmem, size = 0x12000, scoped, tag = 'internal scratch']
  %s0 = inlined_call_operand.hbm [shape: f32[1,2,2], index: 0, kind: input, shape index: {}, may-alias: {0,1}]
  %s1 = inlined_call_operand.hbm [shape: f32[1,2,2], index: 1, kind: output, shape index: {}, may-alias: {0,1}]
  %s2 = sld [smem:[#allocation0]]
  $region18: #{tpu_custom_call.1} parent=0
    _
  %s4 = ssub.s32 1, %s2
  %s5 = scalar_select 0, %s4, %s2
  $region1: #{tpu_custom_call.1} parent=0
    #allocation2 [shape = 'u8[1024]{0}', space=vmem, size = 0x400, scoped, tag = 'input window, operand 0, single buffered']
    #allocation3 [shape = 's32[1]{0}', space=sflag, size = 0x4, scoped, tag = 'scoped memory for tpu_custom_call.1']
    #allocation4 [shape = 's32[1]{0}', space=sflag, size = 0x4, scoped, tag = 'scoped memory for tpu_custom_call.1']
    #allocation5 [shape = 'u8[1024]{0}', space=vmem, size = 0x400, scoped, tag = 'output window, operand 0, single buffered']
    %6 = vsyncpa [#allocation3], 0
    %7 = vsyncpa [#allocation4], 0
    // Predicated region
    $region2: #{tpu_custom_call.1} parent=1 // pred_check
      _
    $region3: #{tpu_custom_call.1} parent=1 // pred_check_branch
      %9 = sbr.rel (0) target = $region5
    $region4: #{tpu_custom_call.1} parent=1 // pred_region
      %s11 = ssub.s32 32, 32
      %12 = vsyncadd [#allocation3], %s11
      %s14 = sshll.u32 [#allocation2], 4
      %s15 = int_to_ptr.vmem [resolvable:$true] %s14
      %17 = dma.hbm_to_vmem [thread:$0]  %s0, 32, %s15, [#allocation3]
    $region5: #{tpu_custom_call.1} parent=1 // pred_fallthru
      _
    // Predicated region
    $region6: #{tpu_custom_call.1} parent=1 // pred_check
      _
    $region7: #{tpu_custom_call.1} parent=1 // pred_check_branch
      %19 = sbr.rel (0) target = $region9
    $region8: #{tpu_custom_call.1} parent=1 // pred_region
      %20 = dma.done [#allocation3], 32
    $region9: #{tpu_custom_call.1} parent=1 // pred_fallthru
      _
    %v21 = vld [vmem:[#allocation2] sm:$0x3]
    %v22 = vlaneseq
    %v23 = vshrl.u32 %v22, 7
    %v24 = vmul.u32 %v23, 2
    %v25 = vlaneseq
    %v26 = vand.u32 %v25, 127
    %v27 = vadd.s32 %v24, %v26
    %v28 = vadd.s32 %v27, 2654435769
    %v29 = vshll.u32 %v28, 13
    %v30 = vxor.u32 %v28, %v29
    %v31 = vshrl.u32 %v30, 17
    %v32 = vxor.u32 %v30, %v31
    %v33 = vshll.u32 %v32, 5
    %v34 = vxor.u32 %v32, %v33
    %v35 = vadd.s32 %v34, 2246822507
    %v36 = vshll.u32 %v35, 13
    %v37 = vxor.u32 %v35, %v36
    %v38 = vshrl.u32 %v37, 17
    %v39 = vxor.u32 %v37, %v38
    %v40 = vshll.u32 %v39, 5
    %v41 = vxor.u32 %v39, %v40
    %vm42 = vcmp.lt.u32.totalorder %v41, 2147483648
    %v43 = vmul.f32 %v21, 2.0
    %v44 = vsel %vm42, %v43, 0.0
    %vm45 = vcmask 9216
    %46 = vst.msk [vmem:[#allocation5] sm:$0x3] %vm45, %v44
    // Predicated region
    $region10: #{tpu_custom_call.1} parent=1 // pred_check
      _
    $region11: #{tpu_custom_call.1} parent=1 // pred_check_branch
      %48 = sbr.rel (0) target = $region13
    $region12: #{tpu_custom_call.1} parent=1 // pred_region
      %s50 = ssub.s32 32, 32
      %51 = vsyncadd [#allocation4], %s50
      %s53 = sshll.u32 [#allocation5], 4
      %s54 = int_to_ptr.vmem [resolvable:$true] %s53
      %56 = dma.vmem_to_hbm [thread:$0]  %s54, 32, %s1, [#allocation4]
    $region13: #{tpu_custom_call.1} parent=1 // pred_fallthru
      _
    // Predicated region
    $region14: #{tpu_custom_call.1} parent=1 // pred_check
      _
    $region15: #{tpu_custom_call.1} parent=1 // pred_check_branch
      %58 = sbr.rel (0) target = $region17
    $region16: #{tpu_custom_call.1} parent=1 // pred_region
      %59 = dma.done [#allocation4], 32
    $region17: #{tpu_custom_call.1} parent=1 // pred_fallthru
      _
    %60 = vsyncpa [#allocation3], 1
    %61 = vsyncpa [#allocation4], 1

</llo_original>
